<compile_context>
chip_gen: v7x
topology: tpu7x:2x2x1
jax: 0.10.0
libtpu: 0.0.40
codegen_flags: <defaults>
</compile_context>

<pallas_src>
import functools

import jax
import jax.numpy as jnp
from jax.experimental import pallas as pl
from jax.experimental.pallas import tpu as pltpu

# ----------------------------- model config ---------------------------------
INP_DIM = 5
OUT_DIM = 1
N_LAYERS = 3
NEURONS_FC = 100
N_TOTAL_LAYERS = N_LAYERS + 2          # fc_inp + 3 hidden + fc_out = 5

LANE = 128     # padded feature width (all layer widths <= 128)
SUBLANE = 8    # batch padding multiple


def _layer_dims():
    """Replicates the layer-size bookkeeping of net_.__init__."""
    dims = []
    neurons = NEURONS_FC
    dims.append((INP_DIM, neurons))                 # fc_inp
    for _ in range(N_LAYERS):                       # hidden_layer{i}
        dims.append((neurons, neurons // 2))
        neurons //= 2
    dims.append((neurons, OUT_DIM))                 # fc_out
    return dims


def _round_up(x, m):
    return ((x + m - 1) // m) * m


# ------------------------------ Pallas kernel --------------------------------
def mlp_kernel(x_ref, w_ref, b_ref, o_ref):
    bt = x_ref.shape[0]
    # Zero-pad the (bt, 5) input block up to the 128-lane width in-register.
    # (Rows >= INP_DIM of w_ref[0] are zero, so padding values never leak.)
    h = jnp.concatenate(
        [x_ref[...], jnp.zeros((bt, LANE - INP_DIM), jnp.float32)], axis=1)

    # fc_inp + 3 hidden layers, tanh activation (fully unrolled).
    for l in range(N_TOTAL_LAYERS - 1):
        h = jnp.tanh(
            jnp.dot(h, w_ref[l], preferred_element_type=jnp.float32)
            + b_ref[l:l + 1, :])

    # fc_out + Identity; only lane 0 of the 128-wide result is real.
    out = (jnp.dot(h, w_ref[N_TOTAL_LAYERS - 1],
                   preferred_element_type=jnp.float32)
           + b_ref[N_TOTAL_LAYERS - 1:N_TOTAL_LAYERS, :])
    o_ref[...] = out[:, :OUT_DIM]


@functools.partial(jax.jit, static_argnames=("batch_tile",))
def net_forward_pallas(x, w_stack, b_stack, batch_tile=512):
    """x: (B, INP_DIM) float32.
    w_stack: (5, LANE, LANE) padded weights laid out as (in, out).
    b_stack: (5, LANE) padded biases."""
    B = x.shape[0]
    # Large tile to amortize per-step overhead, but never bigger than the
    # rounded-up batch (keeps small batches cheap); always a multiple of 8.
    bt = min(_round_up(batch_tile, SUBLANE), _round_up(B, SUBLANE))
    Bp = _round_up(B, bt)
    if Bp != B:
        x = jnp.concatenate(
            [x, jnp.zeros((Bp - B, INP_DIM), x.dtype)], axis=0)

    out = pl.pallas_call(
        mlp_kernel,
        out_shape=jax.ShapeDtypeStruct((Bp, OUT_DIM), jnp.float32),
        grid_spec=pltpu.PrefetchScalarGridSpec(
            num_scalar_prefetch=0,
            grid=(Bp // bt,),
            in_specs=[
                # un-padded input rows: last dim (5) equals the full array dim
                pl.BlockSpec((bt, INP_DIM), lambda i: (i, 0)),
                # all 5 weights / biases in one operand each, constant block
                pl.BlockSpec((N_TOTAL_LAYERS, LANE, LANE), lambda i: (0, 0, 0)),
                pl.BlockSpec((N_TOTAL_LAYERS, LANE), lambda i: (0, 0)),
            ],
            out_specs=pl.BlockSpec((bt, OUT_DIM), lambda i: (i, 0)),
        ),
        compiler_params=pltpu.CompilerParams(
            dimension_semantics=("parallel",)),
    )(x, w_stack, b_stack)

    return out[:B]


# -------------------------- parameter construction ---------------------------
def init_params(key):
    """Xavier-normal weights (nn.init.xavier_normal_), zero biases.

    Returns (w_stack, b_stack):
      w_stack: (5, LANE, LANE), layer l holds W_l as (in, out) in the
               top-left (fan_in, fan_out) corner, zeros elsewhere — so the
               kernel computes x @ W, matching PyTorch's x @ W.T.
      b_stack: (5, LANE), zeros (matches constant_(bias, 0)).
    """
    dims = _layer_dims()
    w_stack = jnp.zeros((N_TOTAL_LAYERS, LANE, LANE), jnp.float32)
    b_stack = jnp.zeros((N_TOTAL_LAYERS, LANE), jnp.float32)
    for l, (fan_in, fan_out) in enumerate(dims):
        key, sub = jax.random.split(key)
        std = (2.0 / (fan_in + fan_out)) ** 0.5
        w = std * jax.random.normal(sub, (fan_in, fan_out), jnp.float32)
        w_stack = w_stack.at[l, :fan_in, :fan_out].set(w)
    return w_stack, b_stack


# ------------------------------ pure-JAX reference ----------------------------
def net_forward_ref(x, w_stack, b_stack):
    dims = _layer_dims()
    h = x
    for l, (fan_in, fan_out) in enumerate(dims):
        w = w_stack[l, :fan_in, :fan_out]
        b = b_stack[l, :fan_out]
        h = h @ w + b
        if l < len(dims) - 1:
            h = jnp.tanh(h)          # hidden activation = tanh
        # final layer activation = Identity
    return h


# ----------------------------------- main -------------------------------------
if __name__ == "__main__":
    key = jax.random.PRNGKey(0)
    key, kx1, kx2 = jax.random.split(key, 3)

    w_stack, b_stack = init_params(key)

    # Small batch (grid of 1, tile capped to 8).
    B1 = 6
    x1 = jax.random.normal(kx1, (B1, INP_DIM), jnp.float32)
    y1 = jax.block_until_ready(net_forward_pallas(x1, w_stack, b_stack))
    y1_ref = net_forward_ref(x1, w_stack, b_stack)
    assert y1.shape == (B1, OUT_DIM), y1.shape
    assert jnp.allclose(y1, y1_ref, atol=1e-4, rtol=1e-4), (y1, y1_ref)

    # Slightly larger batch exercising a multi-step grid (tile=128, grid=3).
    B2 = 300
    x2 = jax.random.normal(kx2, (B2, INP_DIM), jnp.float32)
    y2 = jax.block_until_ready(
        net_forward_pallas(x2, w_stack, b_stack, batch_tile=128))
    y2_ref = net_forward_ref(x2, w_stack, b_stack)
    assert y2.shape == (B2, OUT_DIM), y2.shape
    assert jnp.allclose(y2, y2_ref, atol=1e-4, rtol=1e-4)

    print("KERNEL_OK")
</pallas_src>

<mosaic_0001>
module attributes {stable_mosaic.version = 11 : i64} {
  func.func @mlp_kernel(%arg0: i32, %arg1: memref<8x5xf32, #tpu.memory_space<vmem>>, %arg2: memref<5x128x128xf32, #tpu.memory_space<vmem>>, %arg3: memref<5x128xf32, #tpu.memory_space<vmem>>, %arg4: memref<8x1xf32, #tpu.memory_space<vmem>>) attributes {dimension_semantics = [#tpu.dimension_semantics<parallel>], iteration_bounds = array<i64: 1>, scalar_prefetch = 0 : i64, scratch_operands = 0 : i64, tpu.core_type = #tpu.core_type<tc>, window_params = [{transform_indices = @transform_0, window_bounds = array<i64: 8, 5>}, {pipeline_mode = #tpu.pipeline_mode<synchronous>, transform_indices = @transform_1, window_bounds = array<i64: 5, 128, 128>}, {pipeline_mode = #tpu.pipeline_mode<synchronous>, transform_indices = @transform_2, window_bounds = array<i64: 5, 128>}, {transform_indices = @transform_3, window_bounds = array<i64: 8, 1>}]} {
    %c0 = arith.constant 0 : index
    %c0_0 = arith.constant 0 : index
    %0 = vector.load %arg1[%c0, %c0_0] : memref<8x5xf32, #tpu.memory_space<vmem>>, vector<8x5xf32>
    %cst = arith.constant 0.000000e+00 : f32
    %1 = vector.broadcast %cst : f32 to vector<8x123xf32>
    %2 = tpu.concatenate %0, %1 in 1 : vector<8x5xf32>, vector<8x123xf32> -> vector<8x128xf32>
    %c0_1 = arith.constant 0 : index
    %c0_2 = arith.constant 0 : index
    %c0_3 = arith.constant 0 : index
    %3 = vector.load %arg2[%c0_1, %c0_2, %c0_3] : memref<5x128x128xf32, #tpu.memory_space<vmem>>, vector<1x128x128xf32>
    %4 = vector.shape_cast %3 : vector<1x128x128xf32> to vector<128x128xf32>
    %cst_4 = arith.constant dense<0.000000e+00> : vector<8x128xf32>
    %5 = tpu.matmul %2, %4, %cst_4 {dimension_numbers = #tpu.dot_dimension_numbers<[1], [0], [0], [1], [0, 0, 1, 1], [], []>} : vector<8x128xf32>, vector<128x128xf32>, vector<8x128xf32> -> vector<8x128xf32>
    %c0_5 = arith.constant 0 : index
    %c0_6 = arith.constant 0 : index
    %6 = vector.load %arg3[%c0_5, %c0_6] : memref<5x128xf32, #tpu.memory_space<vmem>>, vector<1x128xf32>
    %7 = vector.broadcast %6 : vector<1x128xf32> to vector<8x128xf32>
    %8 = arith.addf %5, %7 : vector<8x128xf32>
    %9 = math.tanh %8 : vector<8x128xf32>
    %c1 = arith.constant 1 : index
    %c0_7 = arith.constant 0 : index
    %c0_8 = arith.constant 0 : index
    %10 = vector.load %arg2[%c1, %c0_7, %c0_8] : memref<5x128x128xf32, #tpu.memory_space<vmem>>, vector<1x128x128xf32>
    %11 = vector.shape_cast %10 : vector<1x128x128xf32> to vector<128x128xf32>
    %cst_9 = arith.constant dense<0.000000e+00> : vector<8x128xf32>
    %12 = tpu.matmul %9, %11, %cst_9 {dimension_numbers = #tpu.dot_dimension_numbers<[1], [0], [0], [1], [0, 0, 1, 1], [], []>} : vector<8x128xf32>, vector<128x128xf32>, vector<8x128xf32> -> vector<8x128xf32>
    %c1_10 = arith.constant 1 : index
    %c0_11 = arith.constant 0 : index
    %13 = vector.load %arg3[%c1_10, %c0_11] : memref<5x128xf32, #tpu.memory_space<vmem>>, vector<1x128xf32>
    %14 = vector.broadcast %13 : vector<1x128xf32> to vector<8x128xf32>
    %15 = arith.addf %12, %14 : vector<8x128xf32>
    %16 = math.tanh %15 : vector<8x128xf32>
    %c2 = arith.constant 2 : index
    %c0_12 = arith.constant 0 : index
    %c0_13 = arith.constant 0 : index
    %17 = vector.load %arg2[%c2, %c0_12, %c0_13] : memref<5x128x128xf32, #tpu.memory_space<vmem>>, vector<1x128x128xf32>
    %18 = vector.shape_cast %17 : vector<1x128x128xf32> to vector<128x128xf32>
    %cst_14 = arith.constant dense<0.000000e+00> : vector<8x128xf32>
    %19 = tpu.matmul %16, %18, %cst_14 {dimension_numbers = #tpu.dot_dimension_numbers<[1], [0], [0], [1], [0, 0, 1, 1], [], []>} : vector<8x128xf32>, vector<128x128xf32>, vector<8x128xf32> -> vector<8x128xf32>
    %c2_15 = arith.constant 2 : index
    %c0_16 = arith.constant 0 : index
    %20 = vector.load %arg3[%c2_15, %c0_16] : memref<5x128xf32, #tpu.memory_space<vmem>>, vector<1x128xf32>
    %21 = vector.broadcast %20 : vector<1x128xf32> to vector<8x128xf32>
    %22 = arith.addf %19, %21 : vector<8x128xf32>
    %23 = math.tanh %22 : vector<8x128xf32>
    %c3 = arith.constant 3 : index
    %c0_17 = arith.constant 0 : index
    %c0_18 = arith.constant 0 : index
    %24 = vector.load %arg2[%c3, %c0_17, %c0_18] : memref<5x128x128xf32, #tpu.memory_space<vmem>>, vector<1x128x128xf32>
    %25 = vector.shape_cast %24 : vector<1x128x128xf32> to vector<128x128xf32>
    %cst_19 = arith.constant dense<0.000000e+00> : vector<8x128xf32>
    %26 = tpu.matmul %23, %25, %cst_19 {dimension_numbers = #tpu.dot_dimension_numbers<[1], [0], [0], [1], [0, 0, 1, 1], [], []>} : vector<8x128xf32>, vector<128x128xf32>, vector<8x128xf32> -> vector<8x128xf32>
    %c3_20 = arith.constant 3 : index
    %c0_21 = arith.constant 0 : index
    %27 = vector.load %arg3[%c3_20, %c0_21] : memref<5x128xf32, #tpu.memory_space<vmem>>, vector<1x128xf32>
    %28 = vector.broadcast %27 : vector<1x128xf32> to vector<8x128xf32>
    %29 = arith.addf %26, %28 : vector<8x128xf32>
    %30 = math.tanh %29 : vector<8x128xf32>
    %c4 = arith.constant 4 : index
    %c0_22 = arith.constant 0 : index
    %c0_23 = arith.constant 0 : index
    %31 = vector.load %arg2[%c4, %c0_22, %c0_23] : memref<5x128x128xf32, #tpu.memory_space<vmem>>, vector<1x128x128xf32>
    %32 = vector.shape_cast %31 : vector<1x128x128xf32> to vector<128x128xf32>
    %cst_24 = arith.constant dense<0.000000e+00> : vector<8x128xf32>
    %33 = tpu.matmul %30, %32, %cst_24 {dimension_numbers = #tpu.dot_dimension_numbers<[1], [0], [0], [1], [0, 0, 1, 1], [], []>} : vector<8x128xf32>, vector<128x128xf32>, vector<8x128xf32> -> vector<8x128xf32>
    %c4_25 = arith.constant 4 : index
    %c0_26 = arith.constant 0 : index
    %34 = vector.load %arg3[%c4_25, %c0_26] : memref<5x128xf32, #tpu.memory_space<vmem>>, vector<1x128xf32>
    %35 = vector.broadcast %34 : vector<1x128xf32> to vector<8x128xf32>
    %36 = arith.addf %33, %35 : vector<8x128xf32>
    %37 = vector.extract_strided_slice %36 {offsets = [0, 0], sizes = [8, 1], strides = [1, 1]} : vector<8x128xf32> to vector<8x1xf32>
    %c0_27 = arith.constant 0 : index
    %c0_28 = arith.constant 0 : index
    %38 = vector.load %arg4[%c0_27, %c0_28] : memref<8x1xf32, #tpu.memory_space<vmem>>, vector<8x1xf32>
    tpu.vector_store %arg4[%c0_27, %c0_28], %37 {strides = array<i32>} : memref<8x1xf32, #tpu.memory_space<vmem>>, vector<8x1xf32>,
    return
  }
  func.func @transform_0(%arg0: i32) -> (i32, i32) {
    %c0_i32 = arith.constant 0 : i32
    %c0_i32_0 = arith.constant 0 : i32
    return %arg0, %c0_i32 : i32, i32
  }
  func.func @transform_1(%arg0: i32) -> (i32, i32, i32) {
    %c0_i32 = arith.constant 0 : i32
    %c0_i32_0 = arith.constant 0 : i32
    %c0_i32_1 = arith.constant 0 : i32
    %c0_i32_2 = arith.constant 0 : i32
    return %c0_i32, %c0_i32_0, %c0_i32_1 : i32, i32, i32
  }
  func.func @transform_2(%arg0: i32) -> (i32, i32) {
    %c0_i32 = arith.constant 0 : i32
    %c0_i32_0 = arith.constant 0 : i32
    %c0_i32_1 = arith.constant 0 : i32
    return %c0_i32, %c0_i32_0 : i32, i32
  }
  func.func @transform_3(%arg0: i32) -> (i32, i32) {
    %c0_i32 = arith.constant 0 : i32
    %c0_i32_0 = arith.constant 0 : i32
    return %arg0, %c0_i32 : i32, i32
  }
}

</mosaic_0001>

<llo_original>
// kernel: net_forward_pallas.1
$region0: #{net_forward_pallas.1}
  #allocation0 [shape = 'u32[]', space=smem, size = 0x4, offset = 0x4, fixed_abs, tag = 'smem constant byte address 0x4 - core index']
  #allocation1 [shape = 'u32[144,128]{1,0:T(1,128)}', space=vmem, size = 0x12000, scoped, tag = 'internal scratch']
  %s0 = inlined_call_operand.vmem [shape: f32[8,5], index: 0, kind: input, shape index: {}]
  %s1 = inlined_call_operand.hbm [shape: f32[5,128,128], index: 1, kind: input, shape index: {}]
  %s2 = inlined_call_operand.vmem [shape: f32[5,128], index: 2, kind: input, shape index: {}]
  %s3 = inlined_call_operand.vmem [shape: f32[8,1], index: 3, kind: output, shape index: {}]
  %s4 = sld [smem:[#allocation0]]
  $region26: #{net_forward_pallas.1} parent=0
    _
  %s6 = ssub.s32 1, %s4
  %s7 = scalar_select 0, %s6, %s4
  $region1: #{net_forward_pallas.1} parent=0
    #allocation2 [shape = 'u8[327680]{0}', space=vmem, size = 0x50000, scoped, tag = 'input window, operand 1, single buffered']
    #allocation3 [shape = 's32[1]{0}', space=sflag, size = 0x4, scoped, tag = 'scoped memory for net_forward_pallas.1']
    %8 = vsyncpa [#allocation3], 0
    // Predicated region
    $region2: #{net_forward_pallas.1} parent=1 // pred_check
      _
    $region3: #{net_forward_pallas.1} parent=1 // pred_check_branch
      %10 = sbr.rel (0) target = $region5
    $region4: #{net_forward_pallas.1} parent=1 // pred_region
      _
    $region5: #{net_forward_pallas.1} parent=1 // pred_fallthru
      _
    // Predicated region
    $region6: #{net_forward_pallas.1} parent=1 // pred_check
      _
    $region7: #{net_forward_pallas.1} parent=1 // pred_check_branch
      %12 = sbr.rel (0) target = $region9
    $region8: #{net_forward_pallas.1} parent=1 // pred_region
      %s14 = ssub.s32 10240, 10240
      %15 = vsyncadd [#allocation3], %s14
      %s16 = sshll.u32 [#allocation2], 4
      %s17 = int_to_ptr.vmem [resolvable:$true] %s16
      %22 = dma.hbm_to_vmem [thread:$0]  %s1, 10240, %s17, [#allocation3], 128, 128, 8
    $region9: #{net_forward_pallas.1} parent=1 // pred_fallthru
      _
    // Predicated region
    $region10: #{net_forward_pallas.1} parent=1 // pred_check
      _
    $region11: #{net_forward_pallas.1} parent=1 // pred_check_branch
      %24 = sbr.rel (0) target = $region13
    $region12: #{net_forward_pallas.1} parent=1 // pred_region
      _
    $region13: #{net_forward_pallas.1} parent=1 // pred_fallthru
      _
    // Predicated region
    $region14: #{net_forward_pallas.1} parent=1 // pred_check
      _
    $region15: #{net_forward_pallas.1} parent=1 // pred_check_branch
      %26 = sbr.rel (0) target = $region17
    $region16: #{net_forward_pallas.1} parent=1 // pred_region
      %27 = dma.done [#allocation3], 10240
    $region17: #{net_forward_pallas.1} parent=1 // pred_fallthru
      _
    %v28 = vld [vmem:[%s0] sm:$0xff]
    %vm29 = vcmask 39936
    %v30 = vsel %vm29, %v28, 0.0
    %v31 = vld [vmem:[#allocation2] sm:$0xff]
    %v32 = vld [vmem:[#allocation2 + $0x8] sm:$0xff]
    %v33 = vld [vmem:[#allocation2 + $0x10] sm:$0xff]
    %v34 = vld [vmem:[#allocation2 + $0x18] sm:$0xff]
    %v35 = vld [vmem:[#allocation2 + $0x20] sm:$0xff]
    %v36 = vld [vmem:[#allocation2 + $0x28] sm:$0xff]
    %v37 = vld [vmem:[#allocation2 + $0x30] sm:$0xff]
    %v38 = vld [vmem:[#allocation2 + $0x38] sm:$0xff]
    %v39 = vld [vmem:[#allocation2 + $0x40] sm:$0xff]
    %v40 = vld [vmem:[#allocation2 + $0x48] sm:$0xff]
    %v41 = vld [vmem:[#allocation2 + $0x50] sm:$0xff]
    %v42 = vld [vmem:[#allocation2 + $0x58] sm:$0xff]
    %v43 = vld [vmem:[#allocation2 + $0x60] sm:$0xff]
    %v44 = vld [vmem:[#allocation2 + $0x68] sm:$0xff]
    %v45 = vld [vmem:[#allocation2 + $0x70] sm:$0xff]
    %v46 = vld [vmem:[#allocation2 + $0x78] sm:$0xff]
    %v47 = vld [vmem:[%s2] sm:$0x1]
    %v48 = vlaneseq
    %v49 = vshrl.u32 %v48, 7
    %v50 = vsub.s32 0, %v49
    %v51 = vrot.slane %v47, %v50
    %52 = vmatprep.subr.mxu0 0.0
    %53 = vmatpush1.msra.mxu0 %v31
    %54 = vmatprep.subr.mxu0 0.0
    %55 = vmatpush1.msra.mxu0 %v32
    %56 = vmatprep.subr.mxu0 0.0
    %57 = vmatpush1.msra.mxu0 %v33
    %58 = vmatprep.subr.mxu0 0.0
    %59 = vmatpush1.msra.mxu0 %v34
    %60 = vmatprep.subr.mxu0 0.0
    %61 = vmatpush1.msra.mxu0 %v35
    %62 = vmatprep.subr.mxu0 0.0
    %63 = vmatpush1.msra.mxu0 %v36
    %64 = vmatprep.subr.mxu0 0.0
    %65 = vmatpush1.msra.mxu0 %v37
    %66 = vmatprep.subr.mxu0 0.0
    %67 = vmatpush1.msra.mxu0 %v38
    %68 = vmatprep.subr.mxu0 0.0
    %69 = vmatpush1.msra.mxu0 %v39
    %70 = vmatprep.subr.mxu0 0.0
    %71 = vmatpush1.msra.mxu0 %v40
    %72 = vmatprep.subr.mxu0 0.0
    %73 = vmatpush1.msra.mxu0 %v41
    %74 = vmatprep.subr.mxu0 0.0
    %75 = vmatpush1.msra.mxu0 %v42
    %76 = vmatprep.subr.mxu0 0.0
    %77 = vmatpush1.msra.mxu0 %v43
    %78 = vmatprep.subr.mxu0 0.0
    %79 = vmatpush1.msra.mxu0 %v44
    %80 = vmatprep.subr.mxu0 0.0
    %81 = vmatpush1.msra.mxu0 %v45
    %82 = vmatprep.subr.mxu0 0.0
    %83 = vmatpush1.msra.mxu0 %v46
    %84 = vmatprep.subr.mxu0 0.0
    %85 = vmatpush1.msra.mxu0 0.0
    %86 = vmatprep.subr.mxu0 0.0
    %87 = vmatpush1.msra.mxu0 0.0
    %88 = vmatprep.subr.mxu0 0.0
    %89 = vmatpush1.msra.mxu0 0.0
    %90 = vmatprep.subr.mxu0 0.0
    %91 = vmatpush1.msra.mxu0 0.0
    %92 = vmatprep.subr.mxu0 0.0
    %93 = vmatpush1.msra.mxu0 0.0
    %94 = vmatprep.subr.mxu0 0.0
    %95 = vmatpush1.msra.mxu0 0.0
    %96 = vmatprep.subr.mxu0 0.0
    %97 = vmatpush1.msra.mxu0 0.0
    %98 = vmatprep.subr.mxu0 0.0
    %99 = vmatpush1.msra.mxu0 0.0
    %100 = vmatprep.subr.mxu0 0.0
    %101 = vmatpush1.msra.mxu0 0.0
    %102 = vmatprep.subr.mxu0 0.0
    %103 = vmatpush1.msra.mxu0 0.0
    %104 = vmatprep.subr.mxu0 0.0
    %105 = vmatpush1.msra.mxu0 0.0
    %106 = vmatprep.subr.mxu0 0.0
    %107 = vmatpush1.msra.mxu0 0.0
    %108 = vmatprep.subr.mxu0 0.0
    %109 = vmatpush1.msra.mxu0 0.0
    %110 = vmatprep.subr.mxu0 0.0
    %111 = vmatpush1.msra.mxu0 0.0
    %112 = vmatprep.subr.mxu0 0.0
    %113 = vmatpush1.msra.mxu0 0.0
    %114 = vmatprep.subr.mxu0 0.0
    %115 = vmatpush1.msra.mxu0 0.0
    %116 = vmatprep.mubr.f32.mxu0 0.0
    %117 = vmatmul.mubr.f32.gmra.mrb[0].mxu0 %v30
    %v118 = vpop.f32.mrb[0].mxu0
    %v119 = vadd.f32 %v51, %v118
    %v120 = vpop.f32.mrb[0].mxu0
    %121 = vdwg.mxu0
    %v122 = vtanh.pop %v119
    %s123 = scalar_lea.vmem [#allocation2], 128
    %v124 = vld [vmem:[%s123] sm:$0xff]
    %v125 = vld [vmem:[%s123 + $0x8] sm:$0xff]
    %v126 = vld [vmem:[%s123 + $0x10] sm:$0xff]
    %v127 = vld [vmem:[%s123 + $0x18] sm:$0xff]
    %v128 = vld [vmem:[%s123 + $0x20] sm:$0xff]
    %v129 = vld [vmem:[%s123 + $0x28] sm:$0xff]
    %v130 = vld [vmem:[%s123 + $0x30] sm:$0xff]
    %v131 = vld [vmem:[%s123 + $0x38] sm:$0xff]
    %v132 = vld [vmem:[%s123 + $0x40] sm:$0xff]
    %v133 = vld [vmem:[%s123 + $0x48] sm:$0xff]
    %v134 = vld [vmem:[%s123 + $0x50] sm:$0xff]
    %v135 = vld [vmem:[%s123 + $0x58] sm:$0xff]
    %v136 = vld [vmem:[%s123 + $0x60] sm:$0xff]
    %v137 = vld [vmem:[%s123 + $0x68] sm:$0xff]
    %v138 = vld [vmem:[%s123 + $0x70] sm:$0xff]
    %v139 = vld [vmem:[%s123 + $0x78] sm:$0xff]
    %v140 = vld [vmem:[%s2 + $0x1] sm:$0x1]
    %v141 = vlaneseq
    %v142 = vshrl.u32 %v141, 7
    %v143 = vsub.s32 0, %v142
    %v144 = vrot.slane %v140, %v143
    %145 = vmatprep.subr.mxu0 0.0
    %146 = vmatpush1.msra.mxu0 %v124
    %147 = vmatprep.subr.mxu0 0.0
    %148 = vmatpush1.msra.mxu0 %v125
    %149 = vmatprep.subr.mxu0 0.0
    %150 = vmatpush1.msra.mxu0 %v126
    %151 = vmatprep.subr.mxu0 0.0
    %152 = vmatpush1.msra.mxu0 %v127
    %153 = vmatprep.subr.mxu0 0.0
    %154 = vmatpush1.msra.mxu0 %v128
    %155 = vmatprep.subr.mxu0 0.0
    %156 = vmatpush1.msra.mxu0 %v129
    %157 = vmatprep.subr.mxu0 0.0
    %158 = vmatpush1.msra.mxu0 %v130
    %159 = vmatprep.subr.mxu0 0.0
    %160 = vmatpush1.msra.mxu0 %v131
    %161 = vmatprep.subr.mxu0 0.0
    %162 = vmatpush1.msra.mxu0 %v132
    %163 = vmatprep.subr.mxu0 0.0
    %164 = vmatpush1.msra.mxu0 %v133
    %165 = vmatprep.subr.mxu0 0.0
    %166 = vmatpush1.msra.mxu0 %v134
    %167 = vmatprep.subr.mxu0 0.0
    %168 = vmatpush1.msra.mxu0 %v135
    %169 = vmatprep.subr.mxu0 0.0
    %170 = vmatpush1.msra.mxu0 %v136
    %171 = vmatprep.subr.mxu0 0.0
    %172 = vmatpush1.msra.mxu0 %v137
    %173 = vmatprep.subr.mxu0 0.0
    %174 = vmatpush1.msra.mxu0 %v138
    %175 = vmatprep.subr.mxu0 0.0
    %176 = vmatpush1.msra.mxu0 %v139
    %177 = vmatprep.subr.mxu0 0.0
    %178 = vmatpush1.msra.mxu0 0.0
    %179 = vmatprep.subr.mxu0 0.0
    %180 = vmatpush1.msra.mxu0 0.0
    %181 = vmatprep.subr.mxu0 0.0
    %182 = vmatpush1.msra.mxu0 0.0
    %183 = vmatprep.subr.mxu0 0.0
    %184 = vmatpush1.msra.mxu0 0.0
    %185 = vmatprep.subr.mxu0 0.0
    %186 = vmatpush1.msra.mxu0 0.0
    %187 = vmatprep.subr.mxu0 0.0
    %188 = vmatpush1.msra.mxu0 0.0
    %189 = vmatprep.subr.mxu0 0.0
    %190 = vmatpush1.msra.mxu0 0.0
    %191 = vmatprep.subr.mxu0 0.0
    %192 = vmatpush1.msra.mxu0 0.0
    %193 = vmatprep.subr.mxu0 0.0
    %194 = vmatpush1.msra.mxu0 0.0
    %195 = vmatprep.subr.mxu0 0.0
    %196 = vmatpush1.msra.mxu0 0.0
    %197 = vmatprep.subr.mxu0 0.0
    %198 = vmatpush1.msra.mxu0 0.0
    %199 = vmatprep.subr.mxu0 0.0
    %200 = vmatpush1.msra.mxu0 0.0
    %201 = vmatprep.subr.mxu0 0.0
    %202 = vmatpush1.msra.mxu0 0.0
    %203 = vmatprep.subr.mxu0 0.0
    %204 = vmatpush1.msra.mxu0 0.0
    %205 = vmatprep.subr.mxu0 0.0
    %206 = vmatpush1.msra.mxu0 0.0
    %207 = vmatprep.subr.mxu0 0.0
    %208 = vmatpush1.msra.mxu0 0.0
    %209 = vmatprep.mubr.f32.mxu0 0.0
    %210 = vmatmul.mubr.f32.gmra.mrb[0].mxu0 %v122
    %v211 = vpop.f32.mrb[0].mxu0
    %v212 = vadd.f32 %v144, %v211
    %v213 = vpop.f32.mrb[0].mxu0
    %214 = vdwg.mxu0
    %v215 = vtanh.pop %v212
    %s216 = scalar_lea.vmem [#allocation2], 256
    %v217 = vld [vmem:[%s216] sm:$0xff]
    %v218 = vld [vmem:[%s216 + $0x8] sm:$0xff]
    %v219 = vld [vmem:[%s216 + $0x10] sm:$0xff]
    %v220 = vld [vmem:[%s216 + $0x18] sm:$0xff]
    %v221 = vld [vmem:[%s216 + $0x20] sm:$0xff]
    %v222 = vld [vmem:[%s216 + $0x28] sm:$0xff]
    %v223 = vld [vmem:[%s216 + $0x30] sm:$0xff]
    %v224 = vld [vmem:[%s216 + $0x38] sm:$0xff]
    %v225 = vld [vmem:[%s216 + $0x40] sm:$0xff]
    %v226 = vld [vmem:[%s216 + $0x48] sm:$0xff]
    %v227 = vld [vmem:[%s216 + $0x50] sm:$0xff]
    %v228 = vld [vmem:[%s216 + $0x58] sm:$0xff]
    %v229 = vld [vmem:[%s216 + $0x60] sm:$0xff]
    %v230 = vld [vmem:[%s216 + $0x68] sm:$0xff]
    %v231 = vld [vmem:[%s216 + $0x70] sm:$0xff]
    %v232 = vld [vmem:[%s216 + $0x78] sm:$0xff]
    %v233 = vld [vmem:[%s2 + $0x2] sm:$0x1]
    %v234 = vlaneseq
    %v235 = vshrl.u32 %v234, 7
    %v236 = vsub.s32 0, %v235
    %v237 = vrot.slane %v233, %v236
    %238 = vmatprep.subr.mxu0 0.0
    %239 = vmatpush1.msra.mxu0 %v217
    %240 = vmatprep.subr.mxu0 0.0
    %241 = vmatpush1.msra.mxu0 %v218
    %242 = vmatprep.subr.mxu0 0.0
    %243 = vmatpush1.msra.mxu0 %v219
    %244 = vmatprep.subr.mxu0 0.0
    %245 = vmatpush1.msra.mxu0 %v220
    %246 = vmatprep.subr.mxu0 0.0
    %247 = vmatpush1.msra.mxu0 %v221
    %248 = vmatprep.subr.mxu0 0.0
    %249 = vmatpush1.msra.mxu0 %v222
    %250 = vmatprep.subr.mxu0 0.0
    %251 = vmatpush1.msra.mxu0 %v223
    %252 = vmatprep.subr.mxu0 0.0
    %253 = vmatpush1.msra.mxu0 %v224
    %254 = vmatprep.subr.mxu0 0.0
    %255 = vmatpush1.msra.mxu0 %v225
    %256 = vmatprep.subr.mxu0 0.0
    %257 = vmatpush1.msra.mxu0 %v226
    %258 = vmatprep.subr.mxu0 0.0
    %259 = vmatpush1.msra.mxu0 %v227
    %260 = vmatprep.subr.mxu0 0.0
    %261 = vmatpush1.msra.mxu0 %v228
    %262 = vmatprep.subr.mxu0 0.0
    %263 = vmatpush1.msra.mxu0 %v229
    %264 = vmatprep.subr.mxu0 0.0
    %265 = vmatpush1.msra.mxu0 %v230
    %266 = vmatprep.subr.mxu0 0.0
    %267 = vmatpush1.msra.mxu0 %v231
    %268 = vmatprep.subr.mxu0 0.0
    %269 = vmatpush1.msra.mxu0 %v232
    %270 = vmatprep.subr.mxu0 0.0
    %271 = vmatpush1.msra.mxu0 0.0
    %272 = vmatprep.subr.mxu0 0.0
    %273 = vmatpush1.msra.mxu0 0.0
    %274 = vmatprep.subr.mxu0 0.0
    %275 = vmatpush1.msra.mxu0 0.0
    %276 = vmatprep.subr.mxu0 0.0
    %277 = vmatpush1.msra.mxu0 0.0
    %278 = vmatprep.subr.mxu0 0.0
    %279 = vmatpush1.msra.mxu0 0.0
    %280 = vmatprep.subr.mxu0 0.0
    %281 = vmatpush1.msra.mxu0 0.0
    %282 = vmatprep.subr.mxu0 0.0
    %283 = vmatpush1.msra.mxu0 0.0
    %284 = vmatprep.subr.mxu0 0.0
    %285 = vmatpush1.msra.mxu0 0.0
    %286 = vmatprep.subr.mxu0 0.0
    %287 = vmatpush1.msra.mxu0 0.0
    %288 = vmatprep.subr.mxu0 0.0
    %289 = vmatpush1.msra.mxu0 0.0
    %290 = vmatprep.subr.mxu0 0.0
    %291 = vmatpush1.msra.mxu0 0.0
    %292 = vmatprep.subr.mxu0 0.0
    %293 = vmatpush1.msra.mxu0 0.0
    %294 = vmatprep.subr.mxu0 0.0
    %295 = vmatpush1.msra.mxu0 0.0
    %296 = vmatprep.subr.mxu0 0.0
    %297 = vmatpush1.msra.mxu0 0.0
    %298 = vmatprep.subr.mxu0 0.0
    %299 = vmatpush1.msra.mxu0 0.0
    %300 = vmatprep.subr.mxu0 0.0
    %301 = vmatpush1.msra.mxu0 0.0
    %302 = vmatprep.mubr.f32.mxu0 0.0
    %303 = vmatmul.mubr.f32.gmra.mrb[0].mxu0 %v215
    %v304 = vpop.f32.mrb[0].mxu0
    %v305 = vadd.f32 %v237, %v304
    %v306 = vpop.f32.mrb[0].mxu0
    %307 = vdwg.mxu0
    %v308 = vtanh.pop %v305
    %s309 = scalar_lea.vmem [#allocation2], 384
    %v310 = vld [vmem:[%s309] sm:$0xff]
    %v311 = vld [vmem:[%s309 + $0x8] sm:$0xff]
    %v312 = vld [vmem:[%s309 + $0x10] sm:$0xff]
    %v313 = vld [vmem:[%s309 + $0x18] sm:$0xff]
    %v314 = vld [vmem:[%s309 + $0x20] sm:$0xff]
    %v315 = vld [vmem:[%s309 + $0x28] sm:$0xff]
    %v316 = vld [vmem:[%s309 + $0x30] sm:$0xff]
    %v317 = vld [vmem:[%s309 + $0x38] sm:$0xff]
    %v318 = vld [vmem:[%s309 + $0x40] sm:$0xff]
    %v319 = vld [vmem:[%s309 + $0x48] sm:$0xff]
    %v320 = vld [vmem:[%s309 + $0x50] sm:$0xff]
    %v321 = vld [vmem:[%s309 + $0x58] sm:$0xff]
    %v322 = vld [vmem:[%s309 + $0x60] sm:$0xff]
    %v323 = vld [vmem:[%s309 + $0x68] sm:$0xff]
    %v324 = vld [vmem:[%s309 + $0x70] sm:$0xff]
    %v325 = vld [vmem:[%s309 + $0x78] sm:$0xff]
    %v326 = vld [vmem:[%s2 + $0x3] sm:$0x1]
    %v327 = vlaneseq
    %v328 = vshrl.u32 %v327, 7
    %v329 = vsub.s32 0, %v328
    %v330 = vrot.slane %v326, %v329
    %331 = vmatprep.subr.mxu0 0.0
    %332 = vmatpush1.msra.mxu0 %v310
    %333 = vmatprep.subr.mxu0 0.0
    %334 = vmatpush1.msra.mxu0 %v311
    %335 = vmatprep.subr.mxu0 0.0
    %336 = vmatpush1.msra.mxu0 %v312
    %337 = vmatprep.subr.mxu0 0.0
    %338 = vmatpush1.msra.mxu0 %v313
    %339 = vmatprep.subr.mxu0 0.0
    %340 = vmatpush1.msra.mxu0 %v314
    %341 = vmatprep.subr.mxu0 0.0
    %342 = vmatpush1.msra.mxu0 %v315
    %343 = vmatprep.subr.mxu0 0.0
    %344 = vmatpush1.msra.mxu0 %v316
    %345 = vmatprep.subr.mxu0 0.0
    %346 = vmatpush1.msra.mxu0 %v317
    %347 = vmatprep.subr.mxu0 0.0
    %348 = vmatpush1.msra.mxu0 %v318
    %349 = vmatprep.subr.mxu0 0.0
    %350 = vmatpush1.msra.mxu0 %v319
    %351 = vmatprep.subr.mxu0 0.0
    %352 = vmatpush1.msra.mxu0 %v320
    %353 = vmatprep.subr.mxu0 0.0
    %354 = vmatpush1.msra.mxu0 %v321
    %355 = vmatprep.subr.mxu0 0.0
    %356 = vmatpush1.msra.mxu0 %v322
    %357 = vmatprep.subr.mxu0 0.0
    %358 = vmatpush1.msra.mxu0 %v323
    %359 = vmatprep.subr.mxu0 0.0
    %360 = vmatpush1.msra.mxu0 %v324
    %361 = vmatprep.subr.mxu0 0.0
    %362 = vmatpush1.msra.mxu0 %v325
    %363 = vmatprep.subr.mxu0 0.0
    %364 = vmatpush1.msra.mxu0 0.0
    %365 = vmatprep.subr.mxu0 0.0
    %366 = vmatpush1.msra.mxu0 0.0
    %367 = vmatprep.subr.mxu0 0.0
    %368 = vmatpush1.msra.mxu0 0.0
    %369 = vmatprep.subr.mxu0 0.0
    %370 = vmatpush1.msra.mxu0 0.0
    %371 = vmatprep.subr.mxu0 0.0
    %372 = vmatpush1.msra.mxu0 0.0
    %373 = vmatprep.subr.mxu0 0.0
    %374 = vmatpush1.msra.mxu0 0.0
    %375 = vmatprep.subr.mxu0 0.0
    %376 = vmatpush1.msra.mxu0 0.0
    %377 = vmatprep.subr.mxu0 0.0
    %378 = vmatpush1.msra.mxu0 0.0
    %379 = vmatprep.subr.mxu0 0.0
    %380 = vmatpush1.msra.mxu0 0.0
    %381 = vmatprep.subr.mxu0 0.0
    %382 = vmatpush1.msra.mxu0 0.0
    %383 = vmatprep.subr.mxu0 0.0
    %384 = vmatpush1.msra.mxu0 0.0
    %385 = vmatprep.subr.mxu0 0.0
    %386 = vmatpush1.msra.mxu0 0.0
    %387 = vmatprep.subr.mxu0 0.0
    %388 = vmatpush1.msra.mxu0 0.0
    %389 = vmatprep.subr.mxu0 0.0
    %390 = vmatpush1.msra.mxu0 0.0
    %391 = vmatprep.subr.mxu0 0.0
    %392 = vmatpush1.msra.mxu0 0.0
    %393 = vmatprep.subr.mxu0 0.0
    %394 = vmatpush1.msra.mxu0 0.0
    %395 = vmatprep.mubr.f32.mxu0 0.0
    %396 = vmatmul.mubr.f32.gmra.mrb[0].mxu0 %v308
    %v397 = vpop.f32.mrb[0].mxu0
    %v398 = vadd.f32 %v330, %v397
    %v399 = vpop.f32.mrb[0].mxu0
    %400 = vdwg.mxu0
    %v401 = vtanh.pop %v398
    %s402 = scalar_lea.vmem [#allocation2], 512
    %v403 = vld [vmem:[%s402] sm:$0xff]
    %v404 = vld [vmem:[%s402 + $0x8] sm:$0xff]
    %v405 = vld [vmem:[%s402 + $0x10] sm:$0xff]
    %v406 = vld [vmem:[%s402 + $0x18] sm:$0xff]
    %v407 = vld [vmem:[%s402 + $0x20] sm:$0xff]
    %v408 = vld [vmem:[%s402 + $0x28] sm:$0xff]
    %v409 = vld [vmem:[%s402 + $0x30] sm:$0xff]
    %v410 = vld [vmem:[%s402 + $0x38] sm:$0xff]
    %v411 = vld [vmem:[%s402 + $0x40] sm:$0xff]
    %v412 = vld [vmem:[%s402 + $0x48] sm:$0xff]
    %v413 = vld [vmem:[%s402 + $0x50] sm:$0xff]
    %v414 = vld [vmem:[%s402 + $0x58] sm:$0xff]
    %v415 = vld [vmem:[%s402 + $0x60] sm:$0xff]
    %v416 = vld [vmem:[%s402 + $0x68] sm:$0xff]
    %v417 = vld [vmem:[%s402 + $0x70] sm:$0xff]
    %v418 = vld [vmem:[%s402 + $0x78] sm:$0xff]
    %v419 = vld [vmem:[%s2 + $0x4] sm:$0x1]
    %v420 = vlaneseq
    %v421 = vshrl.u32 %v420, 7
    %v422 = vsub.s32 0, %v421
    %v423 = vrot.slane %v419, %v422
    %424 = vmatprep.subr.mxu0 0.0
    %425 = vmatpush1.msra.mxu0 %v403
    %426 = vmatprep.subr.mxu0 0.0
    %427 = vmatpush1.msra.mxu0 %v404
    %428 = vmatprep.subr.mxu0 0.0
    %429 = vmatpush1.msra.mxu0 %v405
    %430 = vmatprep.subr.mxu0 0.0
    %431 = vmatpush1.msra.mxu0 %v406
    %432 = vmatprep.subr.mxu0 0.0
    %433 = vmatpush1.msra.mxu0 %v407
    %434 = vmatprep.subr.mxu0 0.0
    %435 = vmatpush1.msra.mxu0 %v408
    %436 = vmatprep.subr.mxu0 0.0
    %437 = vmatpush1.msra.mxu0 %v409
    %438 = vmatprep.subr.mxu0 0.0
    %439 = vmatpush1.msra.mxu0 %v410
    %440 = vmatprep.subr.mxu0 0.0
    %441 = vmatpush1.msra.mxu0 %v411
    %442 = vmatprep.subr.mxu0 0.0
    %443 = vmatpush1.msra.mxu0 %v412
    %444 = vmatprep.subr.mxu0 0.0
    %445 = vmatpush1.msra.mxu0 %v413
    %446 = vmatprep.subr.mxu0 0.0
    %447 = vmatpush1.msra.mxu0 %v414
    %448 = vmatprep.subr.mxu0 0.0
    %449 = vmatpush1.msra.mxu0 %v415
    %450 = vmatprep.subr.mxu0 0.0
    %451 = vmatpush1.msra.mxu0 %v416
    %452 = vmatprep.subr.mxu0 0.0
    %453 = vmatpush1.msra.mxu0 %v417
    %454 = vmatprep.subr.mxu0 0.0
    %455 = vmatpush1.msra.mxu0 %v418
    %456 = vmatprep.subr.mxu0 0.0
    %457 = vmatpush1.msra.mxu0 0.0
    %458 = vmatprep.subr.mxu0 0.0
    %459 = vmatpush1.msra.mxu0 0.0
    %460 = vmatprep.subr.mxu0 0.0
    %461 = vmatpush1.msra.mxu0 0.0
    %462 = vmatprep.subr.mxu0 0.0
    %463 = vmatpush1.msra.mxu0 0.0
    %464 = vmatprep.subr.mxu0 0.0
    %465 = vmatpush1.msra.mxu0 0.0
    %466 = vmatprep.subr.mxu0 0.0
    %467 = vmatpush1.msra.mxu0 0.0
    %468 = vmatprep.subr.mxu0 0.0
    %469 = vmatpush1.msra.mxu0 0.0
    %470 = vmatprep.subr.mxu0 0.0
    %471 = vmatpush1.msra.mxu0 0.0
    %472 = vmatprep.subr.mxu0 0.0
    %473 = vmatpush1.msra.mxu0 0.0
    %474 = vmatprep.subr.mxu0 0.0
    %475 = vmatpush1.msra.mxu0 0.0
    %476 = vmatprep.subr.mxu0 0.0
    %477 = vmatpush1.msra.mxu0 0.0
    %478 = vmatprep.subr.mxu0 0.0
    %479 = vmatpush1.msra.mxu0 0.0
    %480 = vmatprep.subr.mxu0 0.0
    %481 = vmatpush1.msra.mxu0 0.0
    %482 = vmatprep.subr.mxu0 0.0
    %483 = vmatpush1.msra.mxu0 0.0
    %484 = vmatprep.subr.mxu0 0.0
    %485 = vmatpush1.msra.mxu0 0.0
    %486 = vmatprep.subr.mxu0 0.0
    %487 = vmatpush1.msra.mxu0 0.0
    %488 = vmatprep.mubr.f32.mxu0 0.0
    %489 = vmatmul.mubr.f32.gmra.mrb[0].mxu0 %v401
    %v490 = vpop.f32.mrb[0].mxu0
    %v491 = vadd.f32 %v423, %v490
    %v492 = vpop.f32.mrb[0].mxu0
    %493 = vdwg.mxu0
    %vm494 = vcmask 7168
    %495 = vst.msk [vmem:[%s3] sm:$0xff] %vm494, %v491
    // Predicated region
    $region18: #{net_forward_pallas.1} parent=1 // pred_check
      _
    $region19: #{net_forward_pallas.1} parent=1 // pred_check_branch
      %497 = sbr.rel (0) target = $region21
    $region20: #{net_forward_pallas.1} parent=1 // pred_region
      _
    $region21: #{net_forward_pallas.1} parent=1 // pred_fallthru
      _
    // Predicated region
    $region22: #{net_forward_pallas.1} parent=1 // pred_check
      _
    $region23: #{net_forward_pallas.1} parent=1 // pred_check_branch
      %499 = sbr.rel (0) target = $region25
    $region24: #{net_forward_pallas.1} parent=1 // pred_region
      _
    $region25: #{net_forward_pallas.1} parent=1 // pred_fallthru
      _
    %500 = vsyncpa [#allocation3], 1

</llo_original>
